<compile_context>
chip_gen: v7x
topology: tpu7x:2x2x1
jax: 0.10.0
libtpu: 0.0.40
codegen_flags: <defaults>
</compile_context>

<pallas_src>
import functools

import jax
import jax.numpy as jnp
from jax.experimental import pallas as pl
from jax.experimental.pallas import tpu as pltpu


# ---------------------------------------------------------------------------
# quaternion helpers (Hamilton product, (x, y, z, w) convention as in lietorch)
# operate on tuples of same-shaped arrays -> usable both in-kernel and as ref
# ---------------------------------------------------------------------------
def _qmul(q1, q2):
    x1, y1, z1, w1 = q1
    x2, y2, z2, w2 = q2
    w = w1 * w2 - x1 * x2 - y1 * y2 - z1 * z2
    x = w1 * x2 + x1 * w2 + y1 * z2 - z1 * y2
    y = w1 * y2 - x1 * z2 + y1 * w2 + z1 * x2
    z = w1 * z2 + x1 * y2 - y1 * x2 + z1 * w2
    return (x, y, z, w)


def _qrot(q, v):
    x, y, z, w = q
    vx, vy, vz = v
    tx = 2.0 * (y * vz - z * vy)
    ty = 2.0 * (z * vx - x * vz)
    tz = 2.0 * (x * vy - y * vx)
    rx = vx + w * tx + (y * tz - z * ty)
    ry = vy + w * ty + (z * tx - x * tz)
    rz = vz + w * tz + (x * ty - y * tx)
    return (rx, ry, rz)


def _se3_accumulate(t0, q0, t1, q1, tp, qp):
    """dP = g1 * g0.inv(); out = dP * dP_prev.  SE3 composition: R=R1R2, t=R1 t2 + t1."""
    # g0.inv(): q0i = conj(q0), t0i = -R(q0i) t0
    q0i = (-q0[0], -q0[1], -q0[2], q0[3])
    r = _qrot(q0i, t0)
    t0i = (-r[0], -r[1], -r[2])
    # dP = g1 * g0.inv()
    q_dp = _qmul(q1, q0i)
    r = _qrot(q1, t0i)
    t_dp = (t1[0] + r[0], t1[1] + r[1], t1[2] + r[2])
    # out = dP * dP_prev
    q_out = _qmul(q_dp, qp)
    r = _qrot(q_dp, tp)
    t_out = (t_dp[0] + r[0], t_dp[1] + r[1], t_dp[2] + r[2])
    return t_out, q_out


def _se3_unpack_rows(p):
    """p: (N, 7) lietorch vector [tx,ty,tz,qx,qy,qz,qw] -> ((N,1)*3, (N,1)*4)."""
    t = (p[:, 0:1], p[:, 1:2], p[:, 2:3])
    q = (p[:, 3:4], p[:, 4:5], p[:, 5:6], p[:, 6:7])
    return t, q


# ---------------------------------------------------------------------------
# Kernel 1: tiny one-shot SE3 pose-change accumulation (a handful of vregs).
# Decoupled from the streaming reduce so the frame axis there can be "parallel".
#   poses_ref    : (3, N, 7) f32  [pose_prev; pose_cur; pose_changes_prev]
#   pose_out_ref : (N, 7)    f32
# ---------------------------------------------------------------------------
def _pose_kernel(poses_ref, pose_out_ref):
    t0, q0 = _se3_unpack_rows(poses_ref[0])   # pose_prev
    t1, q1 = _se3_unpack_rows(poses_ref[1])   # pose_cur
    tp, qp = _se3_unpack_rows(poses_ref[2])   # pose_changes_prev
    t_out, q_out = _se3_accumulate(t0, q0, t1, q1, tp, qp)
    # single full-block store
    pose_out_ref[...] = jnp.concatenate(list(t_out) + list(q_out), axis=1)


# ---------------------------------------------------------------------------
# Kernel 2: streaming per-frame mean-disparity scale change.
#   grid = (frame tiles, HW tiles)  -- frame axis "parallel", HW axis "arbitrary"
#   dprev/dcur : (Tt, Kt) tiles of the flattened (T, H*W) disparity maps
#   scale_ref  : (Tt, 1)  output block (written once, at the last K step)
#   sprev/scur : (Tt, 1)  f32 VMEM scratch accumulators
# ---------------------------------------------------------------------------
def _scale_kernel(dprev_ref, dcur_ref, scale_ref, sprev_acc, scur_acc,
                  *, hw, kt, need_mask):
    k = pl.program_id(1)

    @pl.when(k == 0)
    def _():
        sprev_acc[...] = jnp.zeros_like(sprev_acc)
        scur_acc[...] = jnp.zeros_like(scur_acc)

    dp = dprev_ref[...].astype(jnp.float32)
    dc = dcur_ref[...].astype(jnp.float32)
    if need_mask:
        # last K tile runs past H*W: zero the padded lanes so garbage never
        # corrupts the sum of valid rows (static flag, no cost when unused)
        col = k * kt + jax.lax.broadcasted_iota(jnp.int32, dp.shape, 1)
        valid = col < hw
        dp = jnp.where(valid, dp, 0.0)
        dc = jnp.where(valid, dc, 0.0)

    # lane-dense reduce: VPU adds + one cross-lane (XLU) reduce per sublane group
    sprev_acc[...] += jnp.sum(dp, axis=-1, keepdims=True)
    scur_acc[...] += jnp.sum(dc, axis=-1, keepdims=True)

    @pl.when(k == pl.num_programs(1) - 1)
    def _():
        inv_hw = 1.0 / float(hw)
        s_prev = sprev_acc[...] * inv_hw
        s_cur = scur_acc[...] * inv_hw
        denom = s_prev + 1e-6
        # guard against 0-division from garbage in frame-padded rows of a partial
        # T tile (those rows are dropped on writeback; this just avoids NaN/Inf)
        denom = jnp.where(denom == 0.0, 1.0, denom)
        scale_ref[...] = jnp.clip(s_cur / denom, 0.01, 100.0)


# ---------------------------------------------------------------------------
# Per-chip VMEM planning & tile selection
# ---------------------------------------------------------------------------
def _vmem_plan():
    """(explicit input-buffer budget, scoped vmem_limit_bytes) derived per chip."""
    cap = 128 << 20
    try:
        cap = int(getattr(pltpu.get_tpu_info(), "vmem_capacity_bytes", cap))
    except Exception:
        pass
    # 2 inputs x 2 pipeline buffers: ~40% of capacity, capped so a tile sized for
    # v5e/v6e (128 MiB) never overshoots v7x's 64 MiB per TensorCore.
    input_budget = min(int(0.4 * cap), 48 << 20)
    # Scoped VMEM limit handed to Mosaic (v5e's default is only 16 MiB).
    vmem_limit = min(int(0.75 * cap), input_budget + (16 << 20))
    return input_budget, vmem_limit


def _pick_tiles(T, HW, input_budget_bytes, itemsize):
    """(Tt, Kt) for the flattened (T, HW) disparity maps.

    Never exceeds the input budget: if fewer than 8 whole frames fit, we keep
    Tt at 8 (or T) and tile the flattened H*W axis instead (inner reduce axis).
    Tt is a multiple of 8 or == T; Kt is a multiple of 128 or == HW.
    """
    per_elem = 2 * 2 * itemsize                      # 2 inputs, double-buffered
    max_elems = max(1, input_budget_bytes // per_elem)
    frames_fit = max_elems // HW
    if frames_fit >= T:
        return T, HW
    if frames_fit >= 8:
        return (frames_fit // 8) * 8, HW
    Tt = T if T < 8 else 8
    kt = max_elems // max(Tt, 1)
    if kt >= HW:
        return Tt, HW
    return Tt, max(128, (kt // 128) * 128)


# ---------------------------------------------------------------------------
# Wrapper
# ---------------------------------------------------------------------------
def backend_accumulate(poses_before, poses_after, pose_changes_prev,
                       disps_before, disps_after, input_budget_bytes=None):
    """Fused pose-change + scale-change accumulation.

    poses_*  : (N, 7) lietorch SE3 vectors (torch layout, no transpose)
    disps_*  : (T, H, W) disparity maps (f32 or bf16)
    returns (new_pose_changes (N,7), scale_changes (T,))
    """
    poses = jnp.stack([jnp.asarray(poses_before, jnp.float32),
                       jnp.asarray(poses_after, jnp.float32),
                       jnp.asarray(pose_changes_prev, jnp.float32)],
                      axis=0)                                  # (3, N, 7)
    N = poses.shape[1]

    d0 = jnp.asarray(disps_before)
    d1 = jnp.asarray(disps_after)
    T, H, W = d0.shape
    HW = H * W
    d0 = d0.reshape(T, HW)                                     # zero-copy flatten
    d1 = d1.reshape(T, HW)                                     # -> lane-dense blocks

    budget, vmem_limit = _vmem_plan()
    if input_budget_bytes is not None:
        budget = input_budget_bytes
    Tt, Kt = _pick_tiles(T, HW, budget, jnp.dtype(d0.dtype).itemsize)
    grid = (pl.cdiv(T, Tt), pl.cdiv(HW, Kt))

    # --- tiny one-shot pose kernel (no grid; whole arrays resident in VMEM) ---
    pose_out = pl.pallas_call(
        _pose_kernel,
        out_shape=jax.ShapeDtypeStruct((N, 7), jnp.float32),
    )(poses)

    # --- streaming per-frame mean-disparity reduce ---
    scale_out = pl.pallas_call(
        functools.partial(_scale_kernel, hw=HW, kt=Kt,
                          need_mask=(HW % Kt != 0)),
        out_shape=jax.ShapeDtypeStruct((T, 1), jnp.float32),
        grid=grid,
        in_specs=[
            pl.BlockSpec((Tt, Kt), lambda i, k: (i, k)),
            pl.BlockSpec((Tt, Kt), lambda i, k: (i, k)),
        ],
        out_specs=pl.BlockSpec((Tt, 1), lambda i, k: (i, 0)),
        scratch_shapes=[pltpu.VMEM((Tt, 1), jnp.float32),
                        pltpu.VMEM((Tt, 1), jnp.float32)],
        compiler_params=pltpu.CompilerParams(
            # frame axis is embarrassingly parallel (sharded across v7x's 2 TCs);
            # the flattened H*W axis is the reduction -> arbitrary
            dimension_semantics=("parallel", "arbitrary"),
            vmem_limit_bytes=vmem_limit),
    )(d0, d1)

    return pose_out, scale_out[:, 0]


class BackendWrapperPallas:
    """Pallas equivalent of BackendWrapper.forward's concrete tensor math."""

    def __init__(self, max_window=200, steps=4, iters=2, enable_loop=True):
        self.max_window = max_window
        self.steps = steps
        self.iters = iters
        self.enable_loop = enable_loop
        self.last_t = -1
        self.count = 0

    def forward(self, poses_before, poses_after, pose_changes_prev,
                disps_before, disps_after):
        # TODO(synk): FactorGraph / add_proximity_factors / update_lowmem (the CUDA
        # dense-BA solver and lietorch graph machinery) have no Pallas equivalent;
        # the post-optimization poses & disparities are provided as inputs.
        new_pose_changes, scale_changes = backend_accumulate(
            poses_before, poses_after, pose_changes_prev,
            disps_before, disps_after)
        self.count += 1
        return new_pose_changes, scale_changes


# ---------------------------------------------------------------------------
# Pure-JAX references (for correctness check)
# ---------------------------------------------------------------------------
def _ref_pose_change(pose_prev, pose_cur, dpp):
    def unpack(p):
        return (p[:, 0], p[:, 1], p[:, 2]), (p[:, 3], p[:, 4], p[:, 5], p[:, 6])
    t0, q0 = unpack(pose_prev)
    t1, q1 = unpack(pose_cur)
    tp, qp = unpack(dpp)
    t_out, q_out = _se3_accumulate(t0, q0, t1, q1, tp, qp)
    return jnp.stack(list(t_out) + list(q_out), axis=1)


def _ref_scale_change(d0, d1):
    s0 = d0.astype(jnp.float32).mean(axis=(1, 2))
    s1 = d1.astype(jnp.float32).mean(axis=(1, 2))
    return jnp.clip(s1 / (s0 + 1e-6), 0.01, 100.0)


# ---------------------------------------------------------------------------
if __name__ == "__main__":
    key = jax.random.PRNGKey(0)
    ks = jax.random.split(key, 10)

    def rand_se3(k, n):
        kt, kq = jax.random.split(k)
        t = 0.1 * jax.random.normal(kt, (n, 3), jnp.float32)
        q = jax.random.normal(kq, (n, 4), jnp.float32)
        q = q / jnp.linalg.norm(q, axis=1, keepdims=True)
        return jnp.concatenate([t, q], axis=1)          # (n, 7) [tx,ty,tz,qx,qy,qz,qw]

    # ---- test 1: small keyframe window, everything fits one tile ----
    T, H, W = 8, 16, 16
    N = T - 1                                           # poses_before = poses[t0+1:t1]
    poses_before = rand_se3(ks[0], N)
    poses_after = rand_se3(ks[1], N)
    pose_changes_prev = rand_se3(ks[2], N)
    disps_before = jax.random.uniform(ks[3], (T, H, W), jnp.float32, 0.1, 2.0)
    disps_after = jax.random.uniform(ks[4], (T, H, W), jnp.float32, 0.1, 2.0)

    backend = BackendWrapperPallas()
    pose_changes, scale_changes = backend.forward(
        poses_before, poses_after, pose_changes_prev, disps_before, disps_after)
    pose_changes = jax.block_until_ready(pose_changes)
    scale_changes = jax.block_until_ready(scale_changes)

    ref_pc = _ref_pose_change(poses_before, poses_after, pose_changes_prev)
    ref_sc = _ref_scale_change(disps_before, disps_after)
    assert pose_changes.shape == (N, 7) and scale_changes.shape == (T,)
    assert jnp.allclose(pose_changes, ref_pc, atol=1e-5), "pose change mismatch"
    assert jnp.allclose(scale_changes, ref_sc, atol=1e-5), "scale change mismatch"

    # ---- test 2: tiny forced budget -> exercises inner H*W reduction axis,
    #              partial-K masking and a partial frame tile (T % Tt != 0) ----
    T2, H2, W2 = 12, 16, 20                              # HW = 320 (not /128)
    N2 = T2 - 1
    pb2 = rand_se3(ks[5], N2)
    pa2 = rand_se3(ks[6], N2)
    pcp2 = rand_se3(ks[7], N2)
    db2 = jax.random.uniform(ks[8], (T2, H2, W2), jnp.float32, 0.1, 2.0)
    da2 = jax.random.uniform(ks[9], (T2, H2, W2), jnp.float32, 0.1, 2.0)

    pc2, sc2 = backend_accumulate(pb2, pa2, pcp2, db2, da2,
                                  input_budget_bytes=8 * 128 * 16)
    pc2 = jax.block_until_ready(pc2)
    sc2 = jax.block_until_ready(sc2)
    assert jnp.allclose(pc2, _ref_pose_change(pb2, pa2, pcp2), atol=1e-5), \
        "pose change mismatch (tiled)"
    assert jnp.allclose(sc2, _ref_scale_change(db2, da2), atol=1e-5), \
        "scale change mismatch (tiled)"

    print("KERNEL_OK")
</pallas_src>

<mosaic_0001>
module attributes {stable_mosaic.version = 11 : i64} {
  func.func @_pose_kernel(%arg0: memref<3x7x7xf32, #tpu.memory_space<vmem>>, %arg1: memref<7x7xf32, #tpu.memory_space<vmem>>) attributes {dimension_semantics = [], scalar_prefetch = 0 : i64, scratch_operands = 0 : i64, tpu.core_type = #tpu.core_type<tc>} {
    %c0 = arith.constant 0 : index
    %c0_0 = arith.constant 0 : index
    %c0_1 = arith.constant 0 : index
    %0 = vector.load %arg0[%c0, %c0_0, %c0_1] : memref<3x7x7xf32, #tpu.memory_space<vmem>>, vector<1x7x7xf32>
    %1 = vector.shape_cast %0 : vector<1x7x7xf32> to vector<7x7xf32>
    %2 = vector.extract_strided_slice %1 {offsets = [0, 0], sizes = [7, 1], strides = [1, 1]} : vector<7x7xf32> to vector<7x1xf32>
    %3 = vector.extract_strided_slice %1 {offsets = [0, 1], sizes = [7, 1], strides = [1, 1]} : vector<7x7xf32> to vector<7x1xf32>
    %4 = vector.extract_strided_slice %1 {offsets = [0, 2], sizes = [7, 1], strides = [1, 1]} : vector<7x7xf32> to vector<7x1xf32>
    %5 = vector.extract_strided_slice %1 {offsets = [0, 3], sizes = [7, 1], strides = [1, 1]} : vector<7x7xf32> to vector<7x1xf32>
    %6 = vector.extract_strided_slice %1 {offsets = [0, 4], sizes = [7, 1], strides = [1, 1]} : vector<7x7xf32> to vector<7x1xf32>
    %7 = vector.extract_strided_slice %1 {offsets = [0, 5], sizes = [7, 1], strides = [1, 1]} : vector<7x7xf32> to vector<7x1xf32>
    %8 = vector.extract_strided_slice %1 {offsets = [0, 6], sizes = [7, 1], strides = [1, 1]} : vector<7x7xf32> to vector<7x1xf32>
    %c1 = arith.constant 1 : index
    %c0_2 = arith.constant 0 : index
    %c0_3 = arith.constant 0 : index
    %9 = vector.load %arg0[%c1, %c0_2, %c0_3] : memref<3x7x7xf32, #tpu.memory_space<vmem>>, vector<1x7x7xf32>
    %10 = vector.shape_cast %9 : vector<1x7x7xf32> to vector<7x7xf32>
    %11 = vector.extract_strided_slice %10 {offsets = [0, 0], sizes = [7, 1], strides = [1, 1]} : vector<7x7xf32> to vector<7x1xf32>
    %12 = vector.extract_strided_slice %10 {offsets = [0, 1], sizes = [7, 1], strides = [1, 1]} : vector<7x7xf32> to vector<7x1xf32>
    %13 = vector.extract_strided_slice %10 {offsets = [0, 2], sizes = [7, 1], strides = [1, 1]} : vector<7x7xf32> to vector<7x1xf32>
    %14 = vector.extract_strided_slice %10 {offsets = [0, 3], sizes = [7, 1], strides = [1, 1]} : vector<7x7xf32> to vector<7x1xf32>
    %15 = vector.extract_strided_slice %10 {offsets = [0, 4], sizes = [7, 1], strides = [1, 1]} : vector<7x7xf32> to vector<7x1xf32>
    %16 = vector.extract_strided_slice %10 {offsets = [0, 5], sizes = [7, 1], strides = [1, 1]} : vector<7x7xf32> to vector<7x1xf32>
    %17 = vector.extract_strided_slice %10 {offsets = [0, 6], sizes = [7, 1], strides = [1, 1]} : vector<7x7xf32> to vector<7x1xf32>
    %c2 = arith.constant 2 : index
    %c0_4 = arith.constant 0 : index
    %c0_5 = arith.constant 0 : index
    %18 = vector.load %arg0[%c2, %c0_4, %c0_5] : memref<3x7x7xf32, #tpu.memory_space<vmem>>, vector<1x7x7xf32>
    %19 = vector.shape_cast %18 : vector<1x7x7xf32> to vector<7x7xf32>
    %20 = vector.extract_strided_slice %19 {offsets = [0, 0], sizes = [7, 1], strides = [1, 1]} : vector<7x7xf32> to vector<7x1xf32>
    %21 = vector.extract_strided_slice %19 {offsets = [0, 1], sizes = [7, 1], strides = [1, 1]} : vector<7x7xf32> to vector<7x1xf32>
    %22 = vector.extract_strided_slice %19 {offsets = [0, 2], sizes = [7, 1], strides = [1, 1]} : vector<7x7xf32> to vector<7x1xf32>
    %23 = vector.extract_strided_slice %19 {offsets = [0, 3], sizes = [7, 1], strides = [1, 1]} : vector<7x7xf32> to vector<7x1xf32>
    %24 = vector.extract_strided_slice %19 {offsets = [0, 4], sizes = [7, 1], strides = [1, 1]} : vector<7x7xf32> to vector<7x1xf32>
    %25 = vector.extract_strided_slice %19 {offsets = [0, 5], sizes = [7, 1], strides = [1, 1]} : vector<7x7xf32> to vector<7x1xf32>
    %26 = vector.extract_strided_slice %19 {offsets = [0, 6], sizes = [7, 1], strides = [1, 1]} : vector<7x7xf32> to vector<7x1xf32>
    %cst = arith.constant 0.000000e+00 : f32
    %27 = vector.broadcast %cst : f32 to vector<7x1xf32>
    %28 = arith.subf %27, %5 : vector<7x1xf32>
    %cst_6 = arith.constant 0.000000e+00 : f32
    %29 = vector.broadcast %cst_6 : f32 to vector<7x1xf32>
    %30 = arith.subf %29, %6 : vector<7x1xf32>
    %cst_7 = arith.constant 0.000000e+00 : f32
    %31 = vector.broadcast %cst_7 : f32 to vector<7x1xf32>
    %32 = arith.subf %31, %7 : vector<7x1xf32>
    %33 = arith.mulf %30, %4 : vector<7x1xf32>
    %34 = arith.mulf %32, %3 : vector<7x1xf32>
    %35 = arith.subf %33, %34 : vector<7x1xf32>
    %cst_8 = arith.constant 2.000000e+00 : f32
    %36 = vector.broadcast %cst_8 : f32 to vector<7x1xf32>
    %37 = arith.mulf %36, %35 : vector<7x1xf32>
    %38 = arith.mulf %32, %2 : vector<7x1xf32>
    %39 = arith.mulf %28, %4 : vector<7x1xf32>
    %40 = arith.subf %38, %39 : vector<7x1xf32>
    %cst_9 = arith.constant 2.000000e+00 : f32
    %41 = vector.broadcast %cst_9 : f32 to vector<7x1xf32>
    %42 = arith.mulf %41, %40 : vector<7x1xf32>
    %43 = arith.mulf %28, %3 : vector<7x1xf32>
    %44 = arith.mulf %30, %2 : vector<7x1xf32>
    %45 = arith.subf %43, %44 : vector<7x1xf32>
    %cst_10 = arith.constant 2.000000e+00 : f32
    %46 = vector.broadcast %cst_10 : f32 to vector<7x1xf32>
    %47 = arith.mulf %46, %45 : vector<7x1xf32>
    %48 = arith.mulf %8, %37 : vector<7x1xf32>
    %49 = arith.addf %2, %48 : vector<7x1xf32>
    %50 = arith.mulf %30, %47 : vector<7x1xf32>
    %51 = arith.mulf %32, %42 : vector<7x1xf32>
    %52 = arith.subf %50, %51 : vector<7x1xf32>
    %53 = arith.addf %49, %52 : vector<7x1xf32>
    %54 = arith.mulf %8, %42 : vector<7x1xf32>
    %55 = arith.addf %3, %54 : vector<7x1xf32>
    %56 = arith.mulf %32, %37 : vector<7x1xf32>
    %57 = arith.mulf %28, %47 : vector<7x1xf32>
    %58 = arith.subf %56, %57 : vector<7x1xf32>
    %59 = arith.addf %55, %58 : vector<7x1xf32>
    %60 = arith.mulf %8, %47 : vector<7x1xf32>
    %61 = arith.addf %4, %60 : vector<7x1xf32>
    %62 = arith.mulf %28, %42 : vector<7x1xf32>
    %63 = arith.mulf %30, %37 : vector<7x1xf32>
    %64 = arith.subf %62, %63 : vector<7x1xf32>
    %65 = arith.addf %61, %64 : vector<7x1xf32>
    %cst_11 = arith.constant 0.000000e+00 : f32
    %66 = vector.broadcast %cst_11 : f32 to vector<7x1xf32>
    %67 = arith.subf %66, %53 : vector<7x1xf32>
    %cst_12 = arith.constant 0.000000e+00 : f32
    %68 = vector.broadcast %cst_12 : f32 to vector<7x1xf32>
    %69 = arith.subf %68, %59 : vector<7x1xf32>
    %cst_13 = arith.constant 0.000000e+00 : f32
    %70 = vector.broadcast %cst_13 : f32 to vector<7x1xf32>
    %71 = arith.subf %70, %65 : vector<7x1xf32>
    %72 = arith.mulf %17, %8 : vector<7x1xf32>
    %73 = arith.mulf %14, %28 : vector<7x1xf32>
    %74 = arith.subf %72, %73 : vector<7x1xf32>
    %75 = arith.mulf %15, %30 : vector<7x1xf32>
    %76 = arith.subf %74, %75 : vector<7x1xf32>
    %77 = arith.mulf %16, %32 : vector<7x1xf32>
    %78 = arith.subf %76, %77 : vector<7x1xf32>
    %79 = arith.mulf %17, %28 : vector<7x1xf32>
    %80 = arith.mulf %14, %8 : vector<7x1xf32>
    %81 = arith.addf %79, %80 : vector<7x1xf32>
    %82 = arith.mulf %15, %32 : vector<7x1xf32>
    %83 = arith.addf %81, %82 : vector<7x1xf32>
    %84 = arith.mulf %16, %30 : vector<7x1xf32>
    %85 = arith.subf %83, %84 : vector<7x1xf32>
    %86 = arith.mulf %17, %30 : vector<7x1xf32>
    %87 = arith.mulf %14, %32 : vector<7x1xf32>
    %88 = arith.subf %86, %87 : vector<7x1xf32>
    %89 = arith.mulf %15, %8 : vector<7x1xf32>
    %90 = arith.addf %88, %89 : vector<7x1xf32>
    %91 = arith.mulf %16, %28 : vector<7x1xf32>
    %92 = arith.addf %90, %91 : vector<7x1xf32>
    %93 = arith.mulf %17, %32 : vector<7x1xf32>
    %94 = arith.mulf %14, %30 : vector<7x1xf32>
    %95 = arith.addf %93, %94 : vector<7x1xf32>
    %96 = arith.mulf %15, %28 : vector<7x1xf32>
    %97 = arith.subf %95, %96 : vector<7x1xf32>
    %98 = arith.mulf %16, %8 : vector<7x1xf32>
    %99 = arith.addf %97, %98 : vector<7x1xf32>
    %100 = arith.mulf %15, %71 : vector<7x1xf32>
    %101 = arith.mulf %16, %69 : vector<7x1xf32>
    %102 = arith.subf %100, %101 : vector<7x1xf32>
    %cst_14 = arith.constant 2.000000e+00 : f32
    %103 = vector.broadcast %cst_14 : f32 to vector<7x1xf32>
    %104 = arith.mulf %103, %102 : vector<7x1xf32>
    %105 = arith.mulf %16, %67 : vector<7x1xf32>
    %106 = arith.mulf %14, %71 : vector<7x1xf32>
    %107 = arith.subf %105, %106 : vector<7x1xf32>
    %cst_15 = arith.constant 2.000000e+00 : f32
    %108 = vector.broadcast %cst_15 : f32 to vector<7x1xf32>
    %109 = arith.mulf %108, %107 : vector<7x1xf32>
    %110 = arith.mulf %14, %69 : vector<7x1xf32>
    %111 = arith.mulf %15, %67 : vector<7x1xf32>
    %112 = arith.subf %110, %111 : vector<7x1xf32>
    %cst_16 = arith.constant 2.000000e+00 : f32
    %113 = vector.broadcast %cst_16 : f32 to vector<7x1xf32>
    %114 = arith.mulf %113, %112 : vector<7x1xf32>
    %115 = arith.mulf %17, %104 : vector<7x1xf32>
    %116 = arith.addf %67, %115 : vector<7x1xf32>
    %117 = arith.mulf %15, %114 : vector<7x1xf32>
    %118 = arith.mulf %16, %109 : vector<7x1xf32>
    %119 = arith.subf %117, %118 : vector<7x1xf32>
    %120 = arith.addf %116, %119 : vector<7x1xf32>
    %121 = arith.mulf %17, %109 : vector<7x1xf32>
    %122 = arith.addf %69, %121 : vector<7x1xf32>
    %123 = arith.mulf %16, %104 : vector<7x1xf32>
    %124 = arith.mulf %14, %114 : vector<7x1xf32>
    %125 = arith.subf %123, %124 : vector<7x1xf32>
    %126 = arith.addf %122, %125 : vector<7x1xf32>
    %127 = arith.mulf %17, %114 : vector<7x1xf32>
    %128 = arith.addf %71, %127 : vector<7x1xf32>
    %129 = arith.mulf %14, %109 : vector<7x1xf32>
    %130 = arith.mulf %15, %104 : vector<7x1xf32>
    %131 = arith.subf %129, %130 : vector<7x1xf32>
    %132 = arith.addf %128, %131 : vector<7x1xf32>
    %133 = arith.addf %11, %120 : vector<7x1xf32>
    %134 = arith.addf %12, %126 : vector<7x1xf32>
    %135 = arith.addf %13, %132 : vector<7x1xf32>
    %136 = arith.mulf %78, %26 : vector<7x1xf32>
    %137 = arith.mulf %85, %23 : vector<7x1xf32>
    %138 = arith.subf %136, %137 : vector<7x1xf32>
    %139 = arith.mulf %92, %24 : vector<7x1xf32>
    %140 = arith.subf %138, %139 : vector<7x1xf32>
    %141 = arith.mulf %99, %25 : vector<7x1xf32>
    %142 = arith.subf %140, %141 : vector<7x1xf32>
    %143 = arith.mulf %78, %23 : vector<7x1xf32>
    %144 = arith.mulf %85, %26 : vector<7x1xf32>
    %145 = arith.addf %143, %144 : vector<7x1xf32>
    %146 = arith.mulf %92, %25 : vector<7x1xf32>
    %147 = arith.addf %145, %146 : vector<7x1xf32>
    %148 = arith.mulf %99, %24 : vector<7x1xf32>
    %149 = arith.subf %147, %148 : vector<7x1xf32>
    %150 = arith.mulf %78, %24 : vector<7x1xf32>
    %151 = arith.mulf %85, %25 : vector<7x1xf32>
    %152 = arith.subf %150, %151 : vector<7x1xf32>
    %153 = arith.mulf %92, %26 : vector<7x1xf32>
    %154 = arith.addf %152, %153 : vector<7x1xf32>
    %155 = arith.mulf %99, %23 : vector<7x1xf32>
    %156 = arith.addf %154, %155 : vector<7x1xf32>
    %157 = arith.mulf %78, %25 : vector<7x1xf32>
    %158 = arith.mulf %85, %24 : vector<7x1xf32>
    %159 = arith.addf %157, %158 : vector<7x1xf32>
    %160 = arith.mulf %92, %23 : vector<7x1xf32>
    %161 = arith.subf %159, %160 : vector<7x1xf32>
    %162 = arith.mulf %99, %26 : vector<7x1xf32>
    %163 = arith.addf %161, %162 : vector<7x1xf32>
    %164 = arith.mulf %92, %22 : vector<7x1xf32>
    %165 = arith.mulf %99, %21 : vector<7x1xf32>
    %166 = arith.subf %164, %165 : vector<7x1xf32>
    %cst_17 = arith.constant 2.000000e+00 : f32
    %167 = vector.broadcast %cst_17 : f32 to vector<7x1xf32>
    %168 = arith.mulf %167, %166 : vector<7x1xf32>
    %169 = arith.mulf %99, %20 : vector<7x1xf32>
    %170 = arith.mulf %85, %22 : vector<7x1xf32>
    %171 = arith.subf %169, %170 : vector<7x1xf32>
    %cst_18 = arith.constant 2.000000e+00 : f32
    %172 = vector.broadcast %cst_18 : f32 to vector<7x1xf32>
    %173 = arith.mulf %172, %171 : vector<7x1xf32>
    %174 = arith.mulf %85, %21 : vector<7x1xf32>
    %175 = arith.mulf %92, %20 : vector<7x1xf32>
    %176 = arith.subf %174, %175 : vector<7x1xf32>
    %cst_19 = arith.constant 2.000000e+00 : f32
    %177 = vector.broadcast %cst_19 : f32 to vector<7x1xf32>
    %178 = arith.mulf %177, %176 : vector<7x1xf32>
    %179 = arith.mulf %78, %168 : vector<7x1xf32>
    %180 = arith.addf %20, %179 : vector<7x1xf32>
    %181 = arith.mulf %92, %178 : vector<7x1xf32>
    %182 = arith.mulf %99, %173 : vector<7x1xf32>
    %183 = arith.subf %181, %182 : vector<7x1xf32>
    %184 = arith.addf %180, %183 : vector<7x1xf32>
    %185 = arith.mulf %78, %173 : vector<7x1xf32>
    %186 = arith.addf %21, %185 : vector<7x1xf32>
    %187 = arith.mulf %99, %168 : vector<7x1xf32>
    %188 = arith.mulf %85, %178 : vector<7x1xf32>
    %189 = arith.subf %187, %188 : vector<7x1xf32>
    %190 = arith.addf %186, %189 : vector<7x1xf32>
    %191 = arith.mulf %78, %178 : vector<7x1xf32>
    %192 = arith.addf %22, %191 : vector<7x1xf32>
    %193 = arith.mulf %85, %173 : vector<7x1xf32>
    %194 = arith.mulf %92, %168 : vector<7x1xf32>
    %195 = arith.subf %193, %194 : vector<7x1xf32>
    %196 = arith.addf %192, %195 : vector<7x1xf32>
    %197 = arith.addf %133, %184 : vector<7x1xf32>
    %198 = arith.addf %134, %190 : vector<7x1xf32>
    %199 = arith.addf %135, %196 : vector<7x1xf32>
    %200 = tpu.concatenate %197, %198, %199, %149, %156, %163, %142 in 1 : vector<7x1xf32>, vector<7x1xf32>, vector<7x1xf32>, vector<7x1xf32>, vector<7x1xf32>, vector<7x1xf32>, vector<7x1xf32> -> vector<7x7xf32>
    %c0_20 = arith.constant 0 : index
    %c0_21 = arith.constant 0 : index
    %201 = vector.load %arg1[%c0_20, %c0_21] : memref<7x7xf32, #tpu.memory_space<vmem>>, vector<7x7xf32>
    tpu.vector_store %arg1[%c0_20, %c0_21], %200 {strides = array<i32>} : memref<7x7xf32, #tpu.memory_space<vmem>>, vector<7x7xf32>,
    return
  }
}

</mosaic_0001>

<llo_original>
// kernel: tpu_custom_call.1
$region0: #{tpu_custom_call.1}
  #allocation0 [shape = 'u32[]', space=smem, size = 0x4, offset = 0x4, fixed_abs, tag = 'smem constant byte address 0x4 - core index']
  #allocation1 [shape = 'u32[144,128]{1,0:T(1,128)}', space=vmem, size = 0x12000, scoped, tag = 'internal scratch']
  %s0 = inlined_call_operand.hbm [shape: f32[3,7,7], index: 0, kind: input, shape index: {}]
  %s1 = inlined_call_operand.hbm [shape: f32[7,7], index: 1, kind: output, shape index: {}]
  %s2 = sld [smem:[#allocation0]]
  $region18: #{tpu_custom_call.1} parent=0
    _
  %s4 = ssub.s32 1, %s2
  %s5 = scalar_select 0, %s4, %s2
  $region1: #{tpu_custom_call.1} parent=0
    #allocation2 [shape = 'u8[12288]{0}', space=vmem, size = 0x3000, scoped, tag = 'input window, operand 0, single buffered']
    #allocation3 [shape = 's32[1]{0}', space=sflag, size = 0x4, scoped, tag = 'scoped memory for tpu_custom_call.1']
    #allocation4 [shape = 's32[1]{0}', space=sflag, size = 0x4, scoped, tag = 'scoped memory for tpu_custom_call.1']
    #allocation5 [shape = 'u8[4096]{0}', space=vmem, size = 0x1000, scoped, tag = 'output window, operand 0, single buffered']
    %6 = vsyncpa [#allocation3], 0
    %7 = vsyncpa [#allocation4], 0
    // Predicated region
    $region2: #{tpu_custom_call.1} parent=1 // pred_check
      _
    $region3: #{tpu_custom_call.1} parent=1 // pred_check_branch
      %9 = sbr.rel (0) target = $region5
    $region4: #{tpu_custom_call.1} parent=1 // pred_region
      %s11 = ssub.s32 384, 384
      %12 = vsyncadd [#allocation3], %s11
      %s13 = sshll.u32 [#allocation2], 4
      %s14 = int_to_ptr.vmem [resolvable:$true] %s13
      %19 = dma.hbm_to_vmem [thread:$0]  %s0, 384, %s14, [#allocation3], 128, 128, 8
    $region5: #{tpu_custom_call.1} parent=1 // pred_fallthru
      _
    // Predicated region
    $region6: #{tpu_custom_call.1} parent=1 // pred_check
      _
    $region7: #{tpu_custom_call.1} parent=1 // pred_check_branch
      %21 = sbr.rel (0) target = $region9
    $region8: #{tpu_custom_call.1} parent=1 // pred_region
      %22 = dma.done [#allocation3], 384
    $region9: #{tpu_custom_call.1} parent=1 // pred_fallthru
      _
    %v23 = vld [vmem:[#allocation2] sm:$0x7f]
    %s24 = scalar_lea.vmem [#allocation2], 8
    %v25 = vld [vmem:[%s24] sm:$0x7f]
    %s26 = scalar_lea.vmem [#allocation2], 16
    %v27 = vld [vmem:[%s26] sm:$0x7f]
    %v28 = vsub.f32 0.0, %v23
    %30 = vrot.lane.b32.xlu0 %v23, 2
    %v31 = vpop.permute.xlu0 %30
    %v33 = vmul.f32 %v28, %v31
    %34 = vrot.lane.b32.xlu0 %v23, 4
    %v35 = vpop.permute.xlu0 %34
    %v37 = vmul.f32 %v28, %v35
    %39 = vrot.lane.b32.xlu0 %v37, 127
    %v40 = vpop.permute.xlu0 %39
    %v42 = vsub.f32 %v33, %v40
    %v43 = vmul.f32 %v42, 2.0
    %44 = vrot.lane.b32.xlu0 %v23, 5
    %v45 = vpop.permute.xlu0 %44
    %v47 = vmul.f32 %v28, %v45
    %48 = vrot.lane.b32.xlu0 %v23, 1
    %v49 = vpop.permute.xlu0 %48
    %v51 = vmul.f32 %v28, %v49
    %53 = vrot.lane.b32.xlu0 %v51, 2
    %v54 = vpop.permute.xlu0 %53
    %v56 = vsub.f32 %v47, %v54
    %v57 = vmul.f32 %v56, 2.0
    %59 = vrot.lane.b32.xlu0 %v43, 2
    %v60 = vpop.permute.xlu0 %59
    %v62 = vmul.f32 %v23, %v60
    %64 = vrot.lane.b32.xlu0 %v62, 122
    %v65 = vpop.permute.xlu0 %64
    %v67 = vadd.f32 %v23, %v65
    %68 = vrot.lane.b32.xlu0 %v43, 1
    %v69 = vpop.permute.xlu0 %68
    %v71 = vmul.f32 %v28, %v69
    %v72 = vmul.f32 %v28, %v57
    %74 = vrot.lane.b32.xlu0 %v72, 127
    %v75 = vpop.permute.xlu0 %74
    %v77 = vsub.f32 %v71, %v75
    %79 = vrot.lane.b32.xlu0 %v77, 124
    %v80 = vpop.permute.xlu0 %79
    %v82 = vadd.f32 %v67, %v80
    %84 = vrot.lane.b32.xlu0 %v57, 1
    %v85 = vpop.permute.xlu0 %84
    %v87 = vmul.f32 %v23, %v85
    %89 = vrot.lane.b32.xlu0 %v87, 123
    %v90 = vpop.permute.xlu0 %89
    %v92 = vadd.f32 %v23, %v90
    %v93 = vmul.f32 %v28, %v43
    %95 = vrot.lane.b32.xlu0 %v93, 2
    %v96 = vpop.permute.xlu0 %95
    %v98 = vsub.f32 %v71, %v96
    %100 = vrot.lane.b32.xlu0 %v98, 124
    %v101 = vpop.permute.xlu0 %100
    %v103 = vadd.f32 %v92, %v101
    %104 = vrot.lane.b32.xlu0 %v43, 3
    %v105 = vpop.permute.xlu0 %104
    %v107 = vmul.f32 %v23, %v105
    %109 = vrot.lane.b32.xlu0 %v107, 124
    %v110 = vpop.permute.xlu0 %109
    %v112 = vadd.f32 %v23, %v110
    %113 = vrot.lane.b32.xlu0 %v57, 126
    %v114 = vpop.permute.xlu0 %113
    %v116 = vmul.f32 %v28, %v114
    %117 = vrot.lane.b32.xlu0 %v93, 127
    %v118 = vpop.permute.xlu0 %117
    %v120 = vsub.f32 %v116, %v118
    %122 = vrot.lane.b32.xlu0 %v120, 127
    %v123 = vpop.permute.xlu0 %122
    %v125 = vadd.f32 %v112, %v123
    %v126 = vsub.f32 0.0, %v82
    %v127 = vsub.f32 0.0, %v103
    %v128 = vsub.f32 0.0, %v125
    %v129 = vmul.f32 %v25, %v23
    %v130 = vmul.f32 %v25, %v28
    %132 = vrot.lane.b32.xlu0 %v130, 3
    %v133 = vpop.permute.xlu0 %132
    %v135 = vsub.f32 %v129, %v133
    %136 = vrot.lane.b32.xlu0 %v130, 2
    %v137 = vpop.permute.xlu0 %136
    %v139 = vsub.f32 %v135, %v137
    %140 = vrot.lane.b32.xlu0 %v130, 1
    %v141 = vpop.permute.xlu0 %140
    %v143 = vsub.f32 %v139, %v141
    %145 = vrot.lane.b32.xlu0 %v28, 3
    %v146 = vpop.permute.xlu0 %145
    %v148 = vmul.f32 %v25, %v146
    %149 = vrot.lane.b32.xlu0 %v23, 125
    %v150 = vpop.permute.xlu0 %149
    %v152 = vmul.f32 %v25, %v150
    %154 = vrot.lane.b32.xlu0 %v152, 3
    %v155 = vpop.permute.xlu0 %154
    %v157 = vadd.f32 %v148, %v155
    %158 = vrot.lane.b32.xlu0 %v28, 127
    %v159 = vpop.permute.xlu0 %158
    %v161 = vmul.f32 %v25, %v159
    %163 = vrot.lane.b32.xlu0 %v161, 2
    %v164 = vpop.permute.xlu0 %163
    %v166 = vadd.f32 %v157, %v164
    %167 = vrot.lane.b32.xlu0 %v28, 1
    %v168 = vpop.permute.xlu0 %167
    %v170 = vmul.f32 %v25, %v168
    %172 = vrot.lane.b32.xlu0 %v170, 1
    %v173 = vpop.permute.xlu0 %172
    %v175 = vsub.f32 %v166, %v173
    %176 = vrot.lane.b32.xlu0 %v28, 2
    %v177 = vpop.permute.xlu0 %176
    %v179 = vmul.f32 %v25, %v177
    %180 = vrot.lane.b32.xlu0 %v28, 126
    %v181 = vpop.permute.xlu0 %180
    %v183 = vmul.f32 %v25, %v181
    %185 = vrot.lane.b32.xlu0 %v183, 3
    %v186 = vpop.permute.xlu0 %185
    %v188 = vsub.f32 %v179, %v186
    %189 = vrot.lane.b32.xlu0 %v23, 126
    %v190 = vpop.permute.xlu0 %189
    %v192 = vmul.f32 %v25, %v190
    %194 = vrot.lane.b32.xlu0 %v192, 2
    %v195 = vpop.permute.xlu0 %194
    %v197 = vadd.f32 %v188, %v195
    %199 = vrot.lane.b32.xlu0 %v179, 1
    %v200 = vpop.permute.xlu0 %199
    %v202 = vadd.f32 %v197, %v200
    %203 = vrot.lane.b32.xlu0 %v161, 3
    %v204 = vpop.permute.xlu0 %203
    %v206 = vadd.f32 %v170, %v204
    %207 = vrot.lane.b32.xlu0 %v170, 2
    %v208 = vpop.permute.xlu0 %207
    %v210 = vsub.f32 %v206, %v208
    %211 = vrot.lane.b32.xlu0 %v23, 127
    %v212 = vpop.permute.xlu0 %211
    %v214 = vmul.f32 %v25, %v212
    %216 = vrot.lane.b32.xlu0 %v214, 1
    %v217 = vpop.permute.xlu0 %216
    %v219 = vadd.f32 %v210, %v217
    %221 = vrot.lane.b32.xlu0 %v128, 2
    %v222 = vpop.permute.xlu0 %221
    %v224 = vmul.f32 %v25, %v222
    %226 = vrot.lane.b32.xlu0 %v127, 4
    %v227 = vpop.permute.xlu0 %226
    %v229 = vmul.f32 %v25, %v227
    %231 = vrot.lane.b32.xlu0 %v229, 127
    %v232 = vpop.permute.xlu0 %231
    %v234 = vsub.f32 %v224, %v232
    %v235 = vmul.f32 %v234, 2.0
    %237 = vrot.lane.b32.xlu0 %v126, 5
    %v238 = vpop.permute.xlu0 %237
    %v240 = vmul.f32 %v25, %v238
    %241 = vrot.lane.b32.xlu0 %v128, 1
    %v242 = vpop.permute.xlu0 %241
    %v244 = vmul.f32 %v25, %v242
    %246 = vrot.lane.b32.xlu0 %v244, 2
    %v247 = vpop.permute.xlu0 %246
    %v249 = vsub.f32 %v240, %v247
    %v250 = vmul.f32 %v249, 2.0
    %251 = vrot.lane.b32.xlu0 %v127, 2
    %v252 = vpop.permute.xlu0 %251
    %v254 = vmul.f32 %v25, %v252
    %255 = vrot.lane.b32.xlu0 %v126, 4
    %v256 = vpop.permute.xlu0 %255
    %v258 = vmul.f32 %v25, %v256
    %260 = vrot.lane.b32.xlu0 %v258, 127
    %v261 = vpop.permute.xlu0 %260
    %v263 = vsub.f32 %v254, %v261
    %v264 = vmul.f32 %v263, 2.0
    %266 = vrot.lane.b32.xlu0 %v235, 2
    %v267 = vpop.permute.xlu0 %266
    %v269 = vmul.f32 %v25, %v267
    %271 = vrot.lane.b32.xlu0 %v269, 122
    %v272 = vpop.permute.xlu0 %271
    %v274 = vadd.f32 %v126, %v272
    %276 = vrot.lane.b32.xlu0 %v264, 1
    %v277 = vpop.permute.xlu0 %276
    %v279 = vmul.f32 %v25, %v277
    %v280 = vmul.f32 %v25, %v250
    %282 = vrot.lane.b32.xlu0 %v280, 127
    %v283 = vpop.permute.xlu0 %282
    %v285 = vsub.f32 %v279, %v283
    %287 = vrot.lane.b32.xlu0 %v285, 124
    %v288 = vpop.permute.xlu0 %287
    %v290 = vadd.f32 %v274, %v288
    %292 = vrot.lane.b32.xlu0 %v250, 1
    %v293 = vpop.permute.xlu0 %292
    %v295 = vmul.f32 %v25, %v293
    %297 = vrot.lane.b32.xlu0 %v295, 123
    %v298 = vpop.permute.xlu0 %297
    %v300 = vadd.f32 %v127, %v298
    %301 = vrot.lane.b32.xlu0 %v235, 1
    %v302 = vpop.permute.xlu0 %301
    %v304 = vmul.f32 %v25, %v302
    %v305 = vmul.f32 %v25, %v264
    %307 = vrot.lane.b32.xlu0 %v305, 2
    %v308 = vpop.permute.xlu0 %307
    %v310 = vsub.f32 %v304, %v308
    %312 = vrot.lane.b32.xlu0 %v310, 124
    %v313 = vpop.permute.xlu0 %312
    %v315 = vadd.f32 %v300, %v313
    %316 = vrot.lane.b32.xlu0 %v264, 3
    %v317 = vpop.permute.xlu0 %316
    %v319 = vmul.f32 %v25, %v317
    %321 = vrot.lane.b32.xlu0 %v319, 124
    %v322 = vpop.permute.xlu0 %321
    %v324 = vadd.f32 %v128, %v322
    %325 = vrot.lane.b32.xlu0 %v250, 126
    %v326 = vpop.permute.xlu0 %325
    %v328 = vmul.f32 %v25, %v326
    %v329 = vmul.f32 %v25, %v235
    %331 = vrot.lane.b32.xlu0 %v329, 127
    %v332 = vpop.permute.xlu0 %331
    %v334 = vsub.f32 %v328, %v332
    %336 = vrot.lane.b32.xlu0 %v334, 127
    %v337 = vpop.permute.xlu0 %336
    %v339 = vadd.f32 %v324, %v337
    %v340 = vadd.f32 %v25, %v290
    %v341 = vadd.f32 %v25, %v315
    %v342 = vadd.f32 %v25, %v339
    %v343 = vmul.f32 %v143, %v27
    %345 = vrot.lane.b32.xlu0 %v27, 3
    %v346 = vpop.permute.xlu0 %345
    %v348 = vmul.f32 %v175, %v346
    %v349 = vsub.f32 %v343, %v348
    %350 = vrot.lane.b32.xlu0 %v27, 2
    %v351 = vpop.permute.xlu0 %350
    %v353 = vmul.f32 %v202, %v351
    %v354 = vsub.f32 %v349, %v353
    %355 = vrot.lane.b32.xlu0 %v27, 1
    %v356 = vpop.permute.xlu0 %355
    %v358 = vmul.f32 %v219, %v356
    %v359 = vsub.f32 %v354, %v358
    %v360 = vmul.f32 %v143, %v346
    %v361 = vmul.f32 %v175, %v27
    %v362 = vadd.f32 %v360, %v361
    %v363 = vmul.f32 %v202, %v356
    %v364 = vadd.f32 %v362, %v363
    %v365 = vmul.f32 %v219, %v351
    %v366 = vsub.f32 %v364, %v365
    %v367 = vmul.f32 %v143, %v351
    %v368 = vmul.f32 %v175, %v356
    %v369 = vsub.f32 %v367, %v368
    %v370 = vmul.f32 %v202, %v27
    %v371 = vadd.f32 %v369, %v370
    %v372 = vmul.f32 %v219, %v346
    %v373 = vadd.f32 %v371, %v372
    %v374 = vmul.f32 %v143, %v356
    %v375 = vmul.f32 %v175, %v351
    %v376 = vadd.f32 %v374, %v375
    %v377 = vmul.f32 %v202, %v346
    %v378 = vsub.f32 %v376, %v377
    %v379 = vmul.f32 %v219, %v27
    %v380 = vadd.f32 %v378, %v379
    %381 = vrot.lane.b32.xlu0 %v27, 4
    %v382 = vpop.permute.xlu0 %381
    %v384 = vmul.f32 %v202, %v382
    %385 = vrot.lane.b32.xlu0 %v27, 5
    %v386 = vpop.permute.xlu0 %385
    %v388 = vmul.f32 %v219, %v386
    %v389 = vsub.f32 %v384, %v388
    %v390 = vmul.f32 %v389, 2.0
    %391 = vrot.lane.b32.xlu0 %v27, 6
    %v392 = vpop.permute.xlu0 %391
    %v394 = vmul.f32 %v219, %v392
    %v395 = vmul.f32 %v175, %v382
    %v396 = vsub.f32 %v394, %v395
    %v397 = vmul.f32 %v396, 2.0
    %v398 = vmul.f32 %v175, %v386
    %v399 = vmul.f32 %v202, %v392
    %v400 = vsub.f32 %v398, %v399
    %v401 = vmul.f32 %v400, 2.0
    %v402 = vmul.f32 %v143, %v390
    %404 = vrot.lane.b32.xlu0 %v402, 122
    %v405 = vpop.permute.xlu0 %404
    %v407 = vadd.f32 %v27, %v405
    %v408 = vmul.f32 %v202, %v401
    %v409 = vmul.f32 %v219, %v397
    %v410 = vsub.f32 %v408, %v409
    %412 = vrot.lane.b32.xlu0 %v410, 122
    %v413 = vpop.permute.xlu0 %412
    %v415 = vadd.f32 %v407, %v413
    %v416 = vmul.f32 %v143, %v397
    %418 = vrot.lane.b32.xlu0 %v416, 123
    %v419 = vpop.permute.xlu0 %418
    %v421 = vadd.f32 %v27, %v419
    %v422 = vmul.f32 %v219, %v390
    %v423 = vmul.f32 %v175, %v401
    %v424 = vsub.f32 %v422, %v423
    %426 = vrot.lane.b32.xlu0 %v424, 123
    %v427 = vpop.permute.xlu0 %426
    %v429 = vadd.f32 %v421, %v427
    %v430 = vmul.f32 %v143, %v401
    %432 = vrot.lane.b32.xlu0 %v430, 124
    %v433 = vpop.permute.xlu0 %432
    %v435 = vadd.f32 %v27, %v433
    %v436 = vmul.f32 %v175, %v397
    %v437 = vmul.f32 %v202, %v390
    %v438 = vsub.f32 %v436, %v437
    %440 = vrot.lane.b32.xlu0 %v438, 124
    %v441 = vpop.permute.xlu0 %440
    %v443 = vadd.f32 %v435, %v441
    %v444 = vadd.f32 %v340, %v415
    %v445 = vadd.f32 %v341, %v429
    %v446 = vadd.f32 %v342, %v443
    %448 = vrot.lane.b32.xlu0 %v366, 125
    %v449 = vpop.permute.xlu0 %448
    %452 = vrot.lane.b32.xlu0 %v373, 126
    %v453 = vpop.permute.xlu0 %452
    %456 = vrot.lane.b32.xlu0 %v380, 127
    %v457 = vpop.permute.xlu0 %456
    %vm459 = vcmask 7168
    %v460 = vsel %vm459, %v444, %v445
    %vm461 = vcmask 15360
    %v462 = vsel %vm461, %v460, %v446
    %vm463 = vcmask 23552
    %v464 = vsel %vm463, %v462, %v449
    %vm465 = vcmask 31744
    %v466 = vsel %vm465, %v464, %v453
    %vm467 = vcmask 39936
    %v468 = vsel %vm467, %v466, %v457
    %vm469 = vcmask 48128
    %v470 = vsel %vm469, %v468, %v359
    %vm471 = vcmask 55296
    %472 = vst.msk [vmem:[#allocation5] sm:$0x7f] %vm471, %v470
    // Predicated region
    $region10: #{tpu_custom_call.1} parent=1 // pred_check
      _
    $region11: #{tpu_custom_call.1} parent=1 // pred_check_branch
      %474 = sbr.rel (0) target = $region13
    $region12: #{tpu_custom_call.1} parent=1 // pred_region
      %s476 = ssub.s32 128, 128
      %477 = vsyncadd [#allocation4], %s476
      %s479 = sshll.u32 [#allocation5], 4
      %s480 = int_to_ptr.vmem [resolvable:$true] %s479
      %482 = dma.vmem_to_hbm [thread:$0]  %s480, 128, %s1, [#allocation4]
    $region13: #{tpu_custom_call.1} parent=1 // pred_fallthru
      _
    // Predicated region
    $region14: #{tpu_custom_call.1} parent=1 // pred_check
      _
    $region15: #{tpu_custom_call.1} parent=1 // pred_check_branch
      %484 = sbr.rel (0) target = $region17
    $region16: #{tpu_custom_call.1} parent=1 // pred_region
      %485 = dma.done [#allocation4], 128
    $region17: #{tpu_custom_call.1} parent=1 // pred_fallthru
      _
    %486 = vsyncpa [#allocation3], 1
    %487 = vsyncpa [#allocation4], 1

</llo_original>
